<compile_context>
chip_gen: v7x
topology: tpu7x:2x2x1
jax: 0.10.0
libtpu: 0.0.40
codegen_flags: <defaults>
</compile_context>

<pallas_src>
import functools

import numpy as np
import jax
import jax.numpy as jnp
from jax import lax
from jax.experimental import pallas as pl
from jax.experimental.pallas import tpu as pltpu

_EPS = 1e-8


def _round_up(a, b):
    return (a + b - 1) // b * b


def _tile_log_weights(x_rows, x_full, row_start, d_embed, cutoff):
    """Squared distances + log-weights for one row tile.

    x_rows: (tm, d) tile of anchor rows, x_full: (n_pad, d) all rows.
    Returns (log_weights, d2, rid, cid); rid is (tm, 1) global row ids,
    cid is (1, n_pad) column ids.
    """
    tm = x_rows.shape[0]
    n_pad = x_full.shape[0]
    # Contract on dim 1 of both operands: no explicit transpose materialized.
    sim = lax.dot_general(x_rows, x_full, (((1,), (1,)), ((), ())),
                          preferred_element_type=jnp.float32)
    sim = jnp.minimum(sim, 1.0)
    # 1-D iotas; every O(n^2) mask is just a broadcast compare.
    rid = lax.broadcasted_iota(jnp.int32, (tm, 1), 0) + row_start
    cid = lax.broadcasted_iota(jnp.int32, (1, n_pad), 1)
    eye = (rid == cid).astype(jnp.float32)
    # Work in squared distance: log(dist) = 0.5*log(d2), dist*dist = d2, and
    # clamp(dist, min=cutoff) == clamp(d2, min=cutoff^2).  No sqrt needed.
    d2 = 2.0 - 2.0 * sim + eye
    d2 = jnp.maximum(d2, cutoff * cutoff)
    log_w = (0.5 * (2.0 - float(d_embed))) * jnp.log(d2) \
        - (float(d_embed - 3) / 2.0) * jnp.log(jnp.maximum(1.0 - 0.25 * d2, _EPS))
    return log_w, d2, rid, cid


def _dws_stats_kernel(x_rows_ref, x_full_ref, stats_ref, *, n, d, cutoff, tm):
    """Per-row-tile max/min of log_weights over the valid n x n region."""
    row_start = pl.program_id(0) * tm
    log_w, _, rid, cid = _tile_log_weights(x_rows_ref[...], x_full_ref[...],
                                           row_start, d, cutoff)
    valid = jnp.logical_and(rid < n, cid < n)
    big = jnp.float32(3.0e38)
    tile_max = jnp.max(jnp.where(valid, log_w, -big))
    tile_min = jnp.min(jnp.where(valid, log_w, big))
    sub = lax.broadcasted_iota(jnp.int32, (8, 128), 0)
    # Sublane 0 carries the tile max, the remaining sublanes carry the min.
    stats_ref[0, :, :] = jnp.where(sub == 0, tile_max, tile_min)


def _dws_weights_kernel(stats_ref, x_rows_ref, x_full_ref, w_ref, *, n, d,
                        batch_k, cutoff, nonzero_loss_cutoff, normalize, tm):
    row_start = pl.program_id(0) * tm
    log_w, d2, rid, cid = _tile_log_weights(x_rows_ref[...], x_full_ref[...],
                                            row_start, d, cutoff)
    g_max = stats_ref[0]   # global max of log_weights (SMEM scalar)
    g_min = stats_ref[1]   # global min of log_weights (SMEM scalar)
    if normalize:
        denom = g_max - g_min + _EPS
        log_w = (log_w - g_min) / denom
        shift = (g_max - g_min) / denom   # == max of the normalized log-weights
    else:
        shift = g_max
    w = jnp.exp(log_w - shift)
    # Block-diagonal mask from 1-D integer divides.
    mask = ((rid // batch_k) != (cid // batch_k)).astype(jnp.float32)
    near = (d2 < nonzero_loss_cutoff * nonzero_loss_cutoff).astype(jnp.float32)
    w = w * mask * near + _EPS
    # Padded columns must not contribute to the row normalization.
    w = w * (cid < n).astype(jnp.float32)
    w_sum = jnp.sum(w, axis=1, keepdims=True)
    w_ref[...] = w * (1.0 / w_sum)


def distance_weighted_sampling_weights(x, *, batch_k, cutoff=0.5,
                                       nonzero_loss_cutoff=1.4,
                                       normalize=False):
    """Row-normalized sampling weights, (n, n) float32, computed on TPU."""
    n, d = x.shape
    n_pad = _round_up(max(n, 128), 128)   # lane-dense (multiple-of-128) columns
    tm = 128                              # row tile; divides n_pad
    num_tiles = n_pad // tm

    x = x.astype(jnp.float32)
    x_pad = jnp.zeros((n_pad, d), jnp.float32).at[:n, :].set(x)

    compiler_params = pltpu.CompilerParams(
        dimension_semantics=("parallel",),    # row tiles shard across TCs (v7x)
        vmem_limit_bytes=48 * 1024 * 1024,    # stay well under v7x's 64 MiB VMEM
    )
    row_spec = pl.BlockSpec((tm, d), lambda i: (i, 0))
    # Full x stays resident in VMEM (same block index every step -> one DMA).
    full_spec = pl.BlockSpec((n_pad, d), lambda i: (0, 0))

    # Pass 1: per-tile max/min of log_weights (the reference subtracts the
    # *global* max before exp, and normalize=True needs global min/max).
    stats = pl.pallas_call(
        functools.partial(_dws_stats_kernel, n=n, d=d, cutoff=cutoff, tm=tm),
        out_shape=jax.ShapeDtypeStruct((num_tiles, 8, 128), jnp.float32),
        grid=(num_tiles,),
        in_specs=[row_spec, full_spec],
        out_specs=pl.BlockSpec((1, 8, 128), lambda i: (i, 0, 0)),
        compiler_params=compiler_params,
    )(x_pad, x_pad)
    g_max = jnp.max(stats[:, 0, 0])
    g_min = jnp.min(stats[:, 1, 0])
    stats_vec = jnp.stack([g_max, g_min]).astype(jnp.float32)

    # Pass 2: weights.  The unused distance matrix of the original module is
    # never materialized as an output (half the HBM writeback / VMEM residency).
    w_pad = pl.pallas_call(
        functools.partial(_dws_weights_kernel, n=n, d=d, batch_k=batch_k,
                          cutoff=cutoff,
                          nonzero_loss_cutoff=nonzero_loss_cutoff,
                          normalize=normalize, tm=tm),
        out_shape=jax.ShapeDtypeStruct((n_pad, n_pad), jnp.float32),
        grid=(num_tiles,),
        in_specs=[pl.BlockSpec(memory_space=pltpu.MemorySpace.SMEM),
                  row_spec, full_spec],
        out_specs=pl.BlockSpec((tm, n_pad), lambda i: (i, 0)),
        compiler_params=compiler_params,
    )(stats_vec, x_pad, x_pad)
    return w_pad[:n, :n]


def distance_weighted_sampling_forward(x, *, batch_k, cutoff=0.5,
                                       nonzero_loss_cutoff=1.4,
                                       normalize=False, key=None):
    """Mirrors DistanceWeightedSampling.forward.

    Returns (a_indices, x[a_indices], x[p_indices], x[n_indices], x).
    Negative sampling is done on-device with jax.random.categorical (k-1 draws
    per anchor, with replacement, prob = weights row), replacing the host-side
    np.random.choice loop of the reference.
    """
    n, d = x.shape
    k = batch_k
    if key is None:
        key = jax.random.PRNGKey(0)
    weights = distance_weighted_sampling_weights(
        x, batch_k=batch_k, cutoff=cutoff,
        nonzero_loss_cutoff=nonzero_loss_cutoff, normalize=normalize)

    # Negatives: k-1 categorical draws per anchor row (with replacement).
    logits = jnp.log(weights)                                  # (n, n), finite
    n_idx = jax.random.categorical(key, logits[:, None, :], axis=-1,
                                   shape=(n, k - 1)).reshape(-1).astype(jnp.int32)
    # TODO(synk): the reference's fallback to uniform sampling when a row sum
    # is zero is unreachable here (weights carry a +1e-8 floor), so it is not
    # reproduced; nor is the NaN-check debug print.

    # Anchors / positives: deterministic block pattern (all other members of
    # the anchor's class block, in increasing index order).
    i_idx = jnp.arange(n, dtype=jnp.int32)
    blk = i_idx // k
    j_mat = blk[:, None] * k + jnp.arange(k, dtype=jnp.int32)[None, :]
    keep = j_mat != i_idx[:, None]
    p_idx = jnp.sort(jnp.where(keep, j_mat, n), axis=1)[:, :k - 1].reshape(-1)
    a_idx = jnp.repeat(i_idx, k - 1)
    return a_idx, x[a_idx], x[p_idx], x[n_idx], x


def _weights_reference(x, *, batch_k, cutoff, nonzero_loss_cutoff, normalize):
    """Pure-JAX transcription of the PyTorch weight computation."""
    n, d = x.shape
    sim = jnp.minimum(
        jnp.matmul(x, x.T, precision=jax.lax.Precision.HIGHEST), 1.0)
    dist = jnp.sqrt(2.0 - 2.0 * sim + jnp.eye(n, dtype=x.dtype))
    dist = jnp.maximum(dist, cutoff)
    log_w = (2.0 - float(d)) * jnp.log(dist) \
        - (float(d - 3) / 2.0) * jnp.log(jnp.maximum(1.0 - 0.25 * dist * dist, _EPS))
    if normalize:
        log_w = (log_w - log_w.min()) / (log_w.max() - log_w.min() + _EPS)
    w = jnp.exp(log_w - log_w.max())
    rid = jnp.arange(n)[:, None]
    cid = jnp.arange(n)[None, :]
    mask = ((rid // batch_k) != (cid // batch_k)).astype(jnp.float32)
    w = w * mask * (dist < nonzero_loss_cutoff).astype(jnp.float32) + _EPS
    return w / jnp.sum(w, axis=1, keepdims=True)


if __name__ == "__main__":
    # n = 8 embeddings, d = 32, batch_k = 4 (consecutive groups of 4 share a class).
    n, d, batch_k = 8, 32, 4
    key = jax.random.PRNGKey(0)
    xkey, skey = jax.random.split(key)
    x = jax.random.normal(xkey, (n, d), dtype=jnp.float32)
    x = x / jnp.linalg.norm(x, axis=1, keepdims=True)   # cosine-sim style usage

    # Validate kernel weights against the pure-JAX reference (both modes).
    for normalize in (False, True):
        w_k = distance_weighted_sampling_weights(x, batch_k=batch_k,
                                                 normalize=normalize)
        w_r = _weights_reference(x, batch_k=batch_k, cutoff=0.5,
                                 nonzero_loss_cutoff=1.4, normalize=normalize)
        np.testing.assert_allclose(np.asarray(w_k), np.asarray(w_r),
                                   rtol=1e-3, atol=1e-6)

    a_idx, x_a, x_p, x_n, x_out = distance_weighted_sampling_forward(
        x, batch_k=batch_k, key=skey)
    jax.block_until_ready((a_idx, x_a, x_p, x_n, x_out))

    assert a_idx.shape == (n * (batch_k - 1),)
    assert x_a.shape == (n * (batch_k - 1), d)
    assert x_p.shape == (n * (batch_k - 1), d)
    assert x_n.shape == (n * (batch_k - 1), d)
    assert x_out.shape == (n, d)
    print("KERNEL_OK")
</pallas_src>

<mosaic_0001>
module attributes {stable_mosaic.version = 11 : i64} {
  func.func @_dws_stats_kernel(%arg0: i32, %arg1: memref<128x32xf32, #tpu.memory_space<vmem>>, %arg2: memref<128x32xf32, #tpu.memory_space<vmem>>, %arg3: memref<1x8x128xf32, #tpu.memory_space<vmem>>) attributes {dimension_semantics = [#tpu.dimension_semantics<parallel>], iteration_bounds = array<i64: 1>, scalar_prefetch = 0 : i64, scratch_operands = 0 : i64, tpu.core_type = #tpu.core_type<tc>, window_params = [{transform_indices = @transform_0, window_bounds = array<i64: 128, 32>}, {pipeline_mode = #tpu.pipeline_mode<synchronous>, transform_indices = @transform_1, window_bounds = array<i64: 128, 32>}, {transform_indices = @transform_2, window_bounds = array<i64: 1, 8, 128>}]} {
    %c128_i32 = arith.constant 128 : i32
    %0 = arith.muli %arg0, %c128_i32 : i32
    %c0 = arith.constant 0 : index
    %c0_0 = arith.constant 0 : index
    %1 = vector.load %arg1[%c0, %c0_0] : memref<128x32xf32, #tpu.memory_space<vmem>>, vector<128x32xf32>
    %c0_1 = arith.constant 0 : index
    %c0_2 = arith.constant 0 : index
    %2 = vector.load %arg2[%c0_1, %c0_2] : memref<128x32xf32, #tpu.memory_space<vmem>>, vector<128x32xf32>
    %cst = arith.constant dense<0.000000e+00> : vector<128x128xf32>
    %3 = tpu.matmul %1, %2, %cst {dimension_numbers = #tpu.dot_dimension_numbers<[1], [1], [0], [0], [0, 0, 1, 0], [], []>} : vector<128x32xf32>, vector<128x32xf32>, vector<128x128xf32> -> vector<128x128xf32>
    %cst_3 = arith.constant 1.000000e+00 : f32
    %4 = vector.broadcast %cst_3 : f32 to vector<128x128xf32>
    %5 = arith.minimumf %3, %4 : vector<128x128xf32>
    %6 = tpu.iota {dimensions = array<i32: 0>} : vector<128x1xi32>
    %7 = vector.broadcast %0 : i32 to vector<128x1xi32>
    %8 = arith.addi %6, %7 : vector<128x1xi32>
    %9 = tpu.iota {dimensions = array<i32: 1>} : vector<1x128xi32>
    %10 = vector.broadcast %8 : vector<128x1xi32> to vector<128x128xi32>
    %11 = vector.broadcast %9 : vector<1x128xi32> to vector<128x128xi32>
    %12 = arith.cmpi eq, %10, %11 : vector<128x128xi32>
    %13 = arith.extui %12 : vector<128x128xi1> to vector<128x128xi32>
    %14 = arith.sitofp %13 : vector<128x128xi32> to vector<128x128xf32>
    %cst_4 = arith.constant 2.000000e+00 : f32
    %15 = vector.broadcast %cst_4 : f32 to vector<128x128xf32>
    %16 = arith.mulf %15, %5 : vector<128x128xf32>
    %cst_5 = arith.constant 2.000000e+00 : f32
    %17 = vector.broadcast %cst_5 : f32 to vector<128x128xf32>
    %18 = arith.subf %17, %16 : vector<128x128xf32>
    %19 = arith.addf %18, %14 : vector<128x128xf32>
    %cst_6 = arith.constant 2.500000e-01 : f32
    %20 = vector.broadcast %cst_6 : f32 to vector<128x128xf32>
    %21 = arith.maximumf %19, %20 : vector<128x128xf32>
    %22 = math.log %21 : vector<128x128xf32>
    %cst_7 = arith.constant -1.500000e+01 : f32
    %23 = vector.broadcast %cst_7 : f32 to vector<128x128xf32>
    %24 = arith.mulf %23, %22 : vector<128x128xf32>
    %cst_8 = arith.constant 2.500000e-01 : f32
    %25 = vector.broadcast %cst_8 : f32 to vector<128x128xf32>
    %26 = arith.mulf %25, %21 : vector<128x128xf32>
    %cst_9 = arith.constant 1.000000e+00 : f32
    %27 = vector.broadcast %cst_9 : f32 to vector<128x128xf32>
    %28 = arith.subf %27, %26 : vector<128x128xf32>
    %cst_10 = arith.constant 9.99999993E-9 : f32
    %29 = vector.broadcast %cst_10 : f32 to vector<128x128xf32>
    %30 = arith.maximumf %28, %29 : vector<128x128xf32>
    %31 = math.log %30 : vector<128x128xf32>
    %cst_11 = arith.constant 1.450000e+01 : f32
    %32 = vector.broadcast %cst_11 : f32 to vector<128x128xf32>
    %33 = arith.mulf %32, %31 : vector<128x128xf32>
    %34 = arith.subf %24, %33 : vector<128x128xf32>
    %c8_i32 = arith.constant 8 : i32
    %35 = vector.broadcast %c8_i32 : i32 to vector<128x1xi32>
    %36 = arith.cmpi slt, %8, %35 : vector<128x1xi32>
    %c8_i32_12 = arith.constant 8 : i32
    %37 = vector.broadcast %c8_i32_12 : i32 to vector<1x128xi32>
    %38 = arith.cmpi slt, %9, %37 : vector<1x128xi32>
    %39 = vector.broadcast %36 : vector<128x1xi1> to vector<128x128xi1>
    %40 = vector.broadcast %38 : vector<1x128xi1> to vector<128x128xi1>
    %41 = arith.andi %39, %40 : vector<128x128xi1>
    %cst_13 = arith.constant 0.000000e+00 : f32
    %cst_14 = arith.constant 3.000000e+38 : f32
    %42 = arith.subf %cst_13, %cst_14 : f32
    %43 = vector.broadcast %42 : f32 to vector<128x128xf32>
    %44 = arith.select %41, %34, %43 : vector<128x128xi1>, vector<128x128xf32>
    %45 = vector.shape_cast %44 : vector<128x128xf32> to vector<1x128x128xf32>
    %cst_15 = arith.constant dense<0xFF800000> : vector<1xf32>
    %46 = vector.multi_reduction <maximumf>, %45, %cst_15 [1, 2] : vector<1x128x128xf32> to vector<1xf32>
    %47 = vector.shape_cast %46 : vector<1xf32> to vector<1x1x1xf32>
    %48 = vector.extract %47[0, 0, 0] : f32 from vector<1x1x1xf32>
    %cst_16 = arith.constant 3.000000e+38 : f32
    %49 = vector.broadcast %cst_16 : f32 to vector<128x128xf32>
    %50 = arith.select %41, %34, %49 : vector<128x128xi1>, vector<128x128xf32>
    %51 = vector.shape_cast %50 : vector<128x128xf32> to vector<1x128x128xf32>
    %cst_17 = arith.constant dense<0x7F800000> : vector<1xf32>
    %52 = vector.multi_reduction <minimumf>, %51, %cst_17 [1, 2] : vector<1x128x128xf32> to vector<1xf32>
    %53 = vector.shape_cast %52 : vector<1xf32> to vector<1x1x1xf32>
    %54 = vector.extract %53[0, 0, 0] : f32 from vector<1x1x1xf32>
    %55 = tpu.iota {dimensions = array<i32: 0>} : vector<8x128xi32>
    %c0_i32 = arith.constant 0 : i32
    %56 = vector.broadcast %c0_i32 : i32 to vector<8x128xi32>
    %57 = arith.cmpi eq, %55, %56 : vector<8x128xi32>
    %58 = vector.broadcast %48 : f32 to vector<8x128xf32>
    %59 = vector.broadcast %54 : f32 to vector<8x128xf32>
    %60 = arith.select %57, %58, %59 : vector<8x128xi1>, vector<8x128xf32>
    %c0_18 = arith.constant 0 : index
    %c0_19 = arith.constant 0 : index
    %c0_20 = arith.constant 0 : index
    %61 = vector.load %arg3[%c0_18, %c0_19, %c0_20] : memref<1x8x128xf32, #tpu.memory_space<vmem>>, vector<1x8x128xf32>
    %62 = vector.shape_cast %61 : vector<1x8x128xf32> to vector<8x128xf32>
    %63 = vector.shape_cast %60 : vector<8x128xf32> to vector<1x8x128xf32>
    tpu.vector_store %arg3[%c0_18, %c0_19, %c0_20], %63 {strides = array<i32>} : memref<1x8x128xf32, #tpu.memory_space<vmem>>, vector<1x8x128xf32>,
    return
  }
  func.func @transform_0(%arg0: i32) -> (i32, i32) {
    %c0_i32 = arith.constant 0 : i32
    %c0_i32_0 = arith.constant 0 : i32
    return %arg0, %c0_i32 : i32, i32
  }
  func.func @transform_1(%arg0: i32) -> (i32, i32) {
    %c0_i32 = arith.constant 0 : i32
    %c0_i32_0 = arith.constant 0 : i32
    %c0_i32_1 = arith.constant 0 : i32
    return %c0_i32, %c0_i32_0 : i32, i32
  }
  func.func @transform_2(%arg0: i32) -> (i32, i32, i32) {
    %c0_i32 = arith.constant 0 : i32
    %c0_i32_0 = arith.constant 0 : i32
    %c0_i32_1 = arith.constant 0 : i32
    return %arg0, %c0_i32, %c0_i32_0 : i32, i32, i32
  }
}

</mosaic_0001>

<llo_original>
// kernel: tpu_custom_call.1
$region0: #{tpu_custom_call.1}
  #allocation0 [shape = 'u32[]', space=smem, size = 0x4, offset = 0x4, fixed_abs, tag = 'smem constant byte address 0x4 - core index']
  #allocation1 [shape = 'u32[144,128]{1,0:T(1,128)}', space=vmem, size = 0x12000, scoped, tag = 'internal scratch']
  %s0 = inlined_call_operand.vmem [shape: f32[128,32], index: 0, kind: input, shape index: {}]
  %s1 = inlined_call_operand.vmem [shape: f32[128,32], index: 1, kind: input, shape index: {}]
  %s2 = inlined_call_operand.hbm [shape: f32[1,8,128], index: 2, kind: output, shape index: {}]
  %s3 = sld [smem:[#allocation0]]
  $region18: #{tpu_custom_call.1} parent=0
    _
  %s5 = ssub.s32 1, %s3
  %s6 = scalar_select 0, %s5, %s3
  $region1: #{tpu_custom_call.1} parent=0
    #allocation2 [shape = 'u8[4096]{0}', space=vmem, size = 0x1000, scoped, tag = 'output window, operand 0, single buffered']
    #allocation3 [shape = 's32[1]{0}', space=sflag, size = 0x4, scoped, tag = 'scoped memory for tpu_custom_call.1']
    %7 = vsyncpa [#allocation3], 0
    // Predicated region
    $region2: #{tpu_custom_call.1} parent=1 // pred_check
      _
    $region3: #{tpu_custom_call.1} parent=1 // pred_check_branch
      %9 = sbr.rel (0) target = $region5
    $region4: #{tpu_custom_call.1} parent=1 // pred_region
      _
    $region5: #{tpu_custom_call.1} parent=1 // pred_fallthru
      _
    // Predicated region
    $region6: #{tpu_custom_call.1} parent=1 // pred_check
      _
    $region7: #{tpu_custom_call.1} parent=1 // pred_check_branch
      %11 = sbr.rel (0) target = $region9
    $region8: #{tpu_custom_call.1} parent=1 // pred_region
      _
    $region9: #{tpu_custom_call.1} parent=1 // pred_fallthru
      _
    %s12 = smul.u32 0, 128
    %v13 = vld [vmem:[%s0] sm:$0xff]
    %v14 = vld [vmem:[%s0 + $0x8] sm:$0xff]
    %v15 = vld [vmem:[%s0 + $0x10] sm:$0xff]
    %v16 = vld [vmem:[%s0 + $0x18] sm:$0xff]
    %v17 = vld [vmem:[%s0 + $0x20] sm:$0xff]
    %v18 = vld [vmem:[%s0 + $0x28] sm:$0xff]
    %v19 = vld [vmem:[%s0 + $0x30] sm:$0xff]
    %v20 = vld [vmem:[%s0 + $0x38] sm:$0xff]
    %v21 = vld [vmem:[%s0 + $0x40] sm:$0xff]
    %v22 = vld [vmem:[%s0 + $0x48] sm:$0xff]
    %v23 = vld [vmem:[%s0 + $0x50] sm:$0xff]
    %v24 = vld [vmem:[%s0 + $0x58] sm:$0xff]
    %v25 = vld [vmem:[%s0 + $0x60] sm:$0xff]
    %v26 = vld [vmem:[%s0 + $0x68] sm:$0xff]
    %v27 = vld [vmem:[%s0 + $0x70] sm:$0xff]
    %v28 = vld [vmem:[%s0 + $0x78] sm:$0xff]
    %v29 = vld [vmem:[%s1] sm:$0xff]
    %v30 = vld [vmem:[%s1 + $0x8] sm:$0xff]
    %v31 = vld [vmem:[%s1 + $0x10] sm:$0xff]
    %v32 = vld [vmem:[%s1 + $0x18] sm:$0xff]
    %v33 = vld [vmem:[%s1 + $0x20] sm:$0xff]
    %v34 = vld [vmem:[%s1 + $0x28] sm:$0xff]
    %v35 = vld [vmem:[%s1 + $0x30] sm:$0xff]
    %v36 = vld [vmem:[%s1 + $0x38] sm:$0xff]
    %v37 = vld [vmem:[%s1 + $0x40] sm:$0xff]
    %v38 = vld [vmem:[%s1 + $0x48] sm:$0xff]
    %v39 = vld [vmem:[%s1 + $0x50] sm:$0xff]
    %v40 = vld [vmem:[%s1 + $0x58] sm:$0xff]
    %v41 = vld [vmem:[%s1 + $0x60] sm:$0xff]
    %v42 = vld [vmem:[%s1 + $0x68] sm:$0xff]
    %v43 = vld [vmem:[%s1 + $0x70] sm:$0xff]
    %v44 = vld [vmem:[%s1 + $0x78] sm:$0xff]
    %vm45 = vcmask 261120
    %v47 = vsel %vm45, %v13, 0
    %v50 = vsel %vm45, %v14, 0
    %v53 = vsel %vm45, %v15, 0
    %v56 = vsel %vm45, %v16, 0
    %v59 = vsel %vm45, %v17, 0
    %v62 = vsel %vm45, %v18, 0
    %v65 = vsel %vm45, %v19, 0
    %v68 = vsel %vm45, %v20, 0
    %v71 = vsel %vm45, %v21, 0
    %v74 = vsel %vm45, %v22, 0
    %v77 = vsel %vm45, %v23, 0
    %v80 = vsel %vm45, %v24, 0
    %v83 = vsel %vm45, %v25, 0
    %v86 = vsel %vm45, %v26, 0
    %v89 = vsel %vm45, %v27, 0
    %v92 = vsel %vm45, %v28, 0
    %v95 = vsel %vm45, %v29, 0
    %v98 = vsel %vm45, %v30, 0
    %v101 = vsel %vm45, %v31, 0
    %v104 = vsel %vm45, %v32, 0
    %v107 = vsel %vm45, %v33, 0
    %v110 = vsel %vm45, %v34, 0
    %v113 = vsel %vm45, %v35, 0
    %v116 = vsel %vm45, %v36, 0
    %v119 = vsel %vm45, %v37, 0
    %v122 = vsel %vm45, %v38, 0
    %v125 = vsel %vm45, %v39, 0
    %v128 = vsel %vm45, %v40, 0
    %v131 = vsel %vm45, %v41, 0
    %v134 = vsel %vm45, %v42, 0
    %v137 = vsel %vm45, %v43, 0
    %v140 = vsel %vm45, %v44, 0
    %142 = vmatprep.subr.mxu0 0.0
    %143 = vmatpush1.xpose.msra.mxu0 %v95
    %144 = vmatprep.subr.mxu0 0.0
    %145 = vmatpush1.xpose.msra.mxu0 %v98
    %146 = vmatprep.subr.mxu0 0.0
    %147 = vmatpush1.xpose.msra.mxu0 %v101
    %148 = vmatprep.subr.mxu0 0.0
    %149 = vmatpush1.xpose.msra.mxu0 %v104
    %150 = vmatprep.subr.mxu0 0.0
    %151 = vmatpush1.xpose.msra.mxu0 %v107
    %152 = vmatprep.subr.mxu0 0.0
    %153 = vmatpush1.xpose.msra.mxu0 %v110
    %154 = vmatprep.subr.mxu0 0.0
    %155 = vmatpush1.xpose.msra.mxu0 %v113
    %156 = vmatprep.subr.mxu0 0.0
    %157 = vmatpush1.xpose.msra.mxu0 %v116
    %158 = vmatprep.subr.mxu0 0.0
    %159 = vmatpush1.xpose.msra.mxu0 %v119
    %160 = vmatprep.subr.mxu0 0.0
    %161 = vmatpush1.xpose.msra.mxu0 %v122
    %162 = vmatprep.subr.mxu0 0.0
    %163 = vmatpush1.xpose.msra.mxu0 %v125
    %164 = vmatprep.subr.mxu0 0.0
    %165 = vmatpush1.xpose.msra.mxu0 %v128
    %166 = vmatprep.subr.mxu0 0.0
    %167 = vmatpush1.xpose.msra.mxu0 %v131
    %168 = vmatprep.subr.mxu0 0.0
    %169 = vmatpush1.xpose.msra.mxu0 %v134
    %170 = vmatprep.subr.mxu0 0.0
    %171 = vmatpush1.xpose.msra.mxu0 %v137
    %172 = vmatprep.subr.mxu0 0.0
    %173 = vmatpush1.xpose.msra.mxu0 %v140
    %174 = vmatprep.subr.mxu0 0.0
    %175 = vmatpush1.xpose.msra.mxu0 0.0
    %176 = vmatprep.subr.mxu0 0.0
    %177 = vmatpush1.xpose.msra.mxu0 0.0
    %178 = vmatprep.subr.mxu0 0.0
    %179 = vmatpush1.xpose.msra.mxu0 0.0
    %180 = vmatprep.subr.mxu0 0.0
    %181 = vmatpush1.xpose.msra.mxu0 0.0
    %182 = vmatprep.subr.mxu0 0.0
    %183 = vmatpush1.xpose.msra.mxu0 0.0
    %184 = vmatprep.subr.mxu0 0.0
    %185 = vmatpush1.xpose.msra.mxu0 0.0
    %186 = vmatprep.subr.mxu0 0.0
    %187 = vmatpush1.xpose.msra.mxu0 0.0
    %188 = vmatprep.subr.mxu0 0.0
    %189 = vmatpush1.xpose.msra.mxu0 0.0
    %190 = vmatprep.subr.mxu0 0.0
    %191 = vmatpush1.xpose.msra.mxu0 0.0
    %192 = vmatprep.subr.mxu0 0.0
    %193 = vmatpush1.xpose.msra.mxu0 0.0
    %194 = vmatprep.subr.mxu0 0.0
    %195 = vmatpush1.xpose.msra.mxu0 0.0
    %196 = vmatprep.subr.mxu0 0.0
    %197 = vmatpush1.xpose.msra.mxu0 0.0
    %198 = vmatprep.subr.mxu0 0.0
    %199 = vmatpush1.xpose.msra.mxu0 0.0
    %200 = vmatprep.subr.mxu0 0.0
    %201 = vmatpush1.xpose.msra.mxu0 0.0
    %202 = vmatprep.subr.mxu0 0.0
    %203 = vmatpush1.xpose.msra.mxu0 0.0
    %204 = vmatprep.subr.mxu0 0.0
    %205 = vmatpush1.xpose.msra.mxu0 0.0
    %206 = vmatprep.mubr.f32.mxu0 0.0
    %207 = vmatmul.mubr.f32.gmra.mrb[0].mxu0 %v47
    %v208 = vpop.f32.mrb[0].mxu0
    %v209 = vadd.f32 0.0, %v208
    %v210 = vpop.f32.mrb[0].mxu0
    %211 = vmatprep.mubr.f32.mxu0 0.0
    %212 = vmatmul.mubr.f32.gmra.mrb[0].mxu0 %v50
    %v213 = vpop.f32.mrb[0].mxu0
    %v214 = vadd.f32 0.0, %v213
    %v215 = vpop.f32.mrb[0].mxu0
    %216 = vmatprep.mubr.f32.mxu0 0.0
    %217 = vmatmul.mubr.f32.gmra.mrb[0].mxu0 %v53
    %v218 = vpop.f32.mrb[0].mxu0
    %v219 = vadd.f32 0.0, %v218
    %v220 = vpop.f32.mrb[0].mxu0
    %221 = vmatprep.mubr.f32.mxu0 0.0
    %222 = vmatmul.mubr.f32.gmra.mrb[0].mxu0 %v56
    %v223 = vpop.f32.mrb[0].mxu0
    %v224 = vadd.f32 0.0, %v223
    %v225 = vpop.f32.mrb[0].mxu0
    %226 = vmatprep.mubr.f32.mxu0 0.0
    %227 = vmatmul.mubr.f32.gmra.mrb[0].mxu0 %v59
    %v228 = vpop.f32.mrb[0].mxu0
    %v229 = vadd.f32 0.0, %v228
    %v230 = vpop.f32.mrb[0].mxu0
    %231 = vmatprep.mubr.f32.mxu0 0.0
    %232 = vmatmul.mubr.f32.gmra.mrb[0].mxu0 %v62
    %v233 = vpop.f32.mrb[0].mxu0
    %v234 = vadd.f32 0.0, %v233
    %v235 = vpop.f32.mrb[0].mxu0
    %236 = vmatprep.mubr.f32.mxu0 0.0
    %237 = vmatmul.mubr.f32.gmra.mrb[0].mxu0 %v65
    %v238 = vpop.f32.mrb[0].mxu0
    %v239 = vadd.f32 0.0, %v238
    %v240 = vpop.f32.mrb[0].mxu0
    %241 = vmatprep.mubr.f32.mxu0 0.0
    %242 = vmatmul.mubr.f32.gmra.mrb[0].mxu0 %v68
    %v243 = vpop.f32.mrb[0].mxu0
    %v244 = vadd.f32 0.0, %v243
    %v245 = vpop.f32.mrb[0].mxu0
    %246 = vmatprep.mubr.f32.mxu0 0.0
    %247 = vmatmul.mubr.f32.gmra.mrb[0].mxu0 %v71
    %v248 = vpop.f32.mrb[0].mxu0
    %v249 = vadd.f32 0.0, %v248
    %v250 = vpop.f32.mrb[0].mxu0
    %251 = vmatprep.mubr.f32.mxu0 0.0
    %252 = vmatmul.mubr.f32.gmra.mrb[0].mxu0 %v74
    %v253 = vpop.f32.mrb[0].mxu0
    %v254 = vadd.f32 0.0, %v253
    %v255 = vpop.f32.mrb[0].mxu0
    %256 = vmatprep.mubr.f32.mxu0 0.0
    %257 = vmatmul.mubr.f32.gmra.mrb[0].mxu0 %v77
    %v258 = vpop.f32.mrb[0].mxu0
    %v259 = vadd.f32 0.0, %v258
    %v260 = vpop.f32.mrb[0].mxu0
    %261 = vmatprep.mubr.f32.mxu0 0.0
    %262 = vmatmul.mubr.f32.gmra.mrb[0].mxu0 %v80
    %v263 = vpop.f32.mrb[0].mxu0
    %v264 = vadd.f32 0.0, %v263
    %v265 = vpop.f32.mrb[0].mxu0
    %266 = vmatprep.mubr.f32.mxu0 0.0
    %267 = vmatmul.mubr.f32.gmra.mrb[0].mxu0 %v83
    %v268 = vpop.f32.mrb[0].mxu0
    %v269 = vadd.f32 0.0, %v268
    %v270 = vpop.f32.mrb[0].mxu0
    %271 = vmatprep.mubr.f32.mxu0 0.0
    %272 = vmatmul.mubr.f32.gmra.mrb[0].mxu0 %v86
    %v273 = vpop.f32.mrb[0].mxu0
    %v274 = vadd.f32 0.0, %v273
    %v275 = vpop.f32.mrb[0].mxu0
    %276 = vmatprep.mubr.f32.mxu0 0.0
    %277 = vmatmul.mubr.f32.gmra.mrb[0].mxu0 %v89
    %v278 = vpop.f32.mrb[0].mxu0
    %v279 = vadd.f32 0.0, %v278
    %v280 = vpop.f32.mrb[0].mxu0
    %281 = vmatprep.mubr.f32.mxu0 0.0
    %282 = vmatmul.mubr.f32.gmra.mrb[0].mxu0 %v92
    %v283 = vpop.f32.mrb[0].mxu0
    %v284 = vadd.f32 0.0, %v283
    %v285 = vpop.f32.mrb[0].mxu0
    %286 = vdwg.mxu0
    %v287 = vmin.f32 %v209, 1.0
    %v288 = vmin.f32 %v214, 1.0
    %v289 = vmin.f32 %v219, 1.0
    %v290 = vmin.f32 %v224, 1.0
    %v291 = vmin.f32 %v229, 1.0
    %v292 = vmin.f32 %v234, 1.0
    %v293 = vmin.f32 %v239, 1.0
    %v294 = vmin.f32 %v244, 1.0
    %v295 = vmin.f32 %v249, 1.0
    %v296 = vmin.f32 %v254, 1.0
    %v297 = vmin.f32 %v259, 1.0
    %v298 = vmin.f32 %v264, 1.0
    %v299 = vmin.f32 %v269, 1.0
    %v300 = vmin.f32 %v274, 1.0
    %v301 = vmin.f32 %v279, 1.0
    %v302 = vmin.f32 %v284, 1.0
    %v303 = vlaneseq
    %v304 = vshrl.u32 %v303, 7
    %v305 = vadd.s32 %v304, 8
    %v306 = vadd.s32 %v304, 16
    %v307 = vadd.s32 %v304, 24
    %v308 = vadd.s32 %v304, 32
    %v309 = vadd.s32 %v304, 40
    %v310 = vadd.s32 %v304, 48
    %v311 = vadd.s32 %v304, 56
    %v312 = vadd.s32 %v304, 64
    %v313 = vadd.s32 %v304, 72
    %v314 = vadd.s32 %v304, 80
    %v315 = vadd.s32 %v304, 88
    %v316 = vadd.s32 %v304, 96
    %v317 = vadd.s32 %v304, 104
    %v318 = vadd.s32 %v304, 112
    %v319 = vadd.s32 %v304, 120
    %v320 = vstv %s12
    %v321 = vadd.s32 %v304, %v320
    %v322 = vadd.s32 %v305, %v320
    %v323 = vadd.s32 %v306, %v320
    %v324 = vadd.s32 %v307, %v320
    %v325 = vadd.s32 %v308, %v320
    %v326 = vadd.s32 %v309, %v320
    %v327 = vadd.s32 %v310, %v320
    %v328 = vadd.s32 %v311, %v320
    %v329 = vadd.s32 %v312, %v320
    %v330 = vadd.s32 %v313, %v320
    %v331 = vadd.s32 %v314, %v320
    %v332 = vadd.s32 %v315, %v320
    %v333 = vadd.s32 %v316, %v320
    %v334 = vadd.s32 %v317, %v320
    %v335 = vadd.s32 %v318, %v320
    %v336 = vadd.s32 %v319, %v320
    %v337 = vlaneseq
    %v338 = vand.u32 %v337, 127
    %vm339 = vcmp.eq.s32.totalorder %v321, %v338
    %vm340 = vcmp.eq.s32.totalorder %v322, %v338
    %vm341 = vcmp.eq.s32.totalorder %v323, %v338
    %vm342 = vcmp.eq.s32.totalorder %v324, %v338
    %vm343 = vcmp.eq.s32.totalorder %v325, %v338
    %vm344 = vcmp.eq.s32.totalorder %v326, %v338
    %vm345 = vcmp.eq.s32.totalorder %v327, %v338
    %vm346 = vcmp.eq.s32.totalorder %v328, %v338
    %vm347 = vcmp.eq.s32.totalorder %v329, %v338
    %vm348 = vcmp.eq.s32.totalorder %v330, %v338
    %vm349 = vcmp.eq.s32.totalorder %v331, %v338
    %vm350 = vcmp.eq.s32.totalorder %v332, %v338
    %vm351 = vcmp.eq.s32.totalorder %v333, %v338
    %vm352 = vcmp.eq.s32.totalorder %v334, %v338
    %vm353 = vcmp.eq.s32.totalorder %v335, %v338
    %vm354 = vcmp.eq.s32.totalorder %v336, %v338
    %v355 = vsel %vm339, 1, 0
    %v356 = vsel %vm340, 1, 0
    %v357 = vsel %vm341, 1, 0
    %v358 = vsel %vm342, 1, 0
    %v359 = vsel %vm343, 1, 0
    %v360 = vsel %vm344, 1, 0
    %v361 = vsel %vm345, 1, 0
    %v362 = vsel %vm346, 1, 0
    %v363 = vsel %vm347, 1, 0
    %v364 = vsel %vm348, 1, 0
    %v365 = vsel %vm349, 1, 0
    %v366 = vsel %vm350, 1, 0
    %v367 = vsel %vm351, 1, 0
    %v368 = vsel %vm352, 1, 0
    %v369 = vsel %vm353, 1, 0
    %v370 = vsel %vm354, 1, 0
    %v371 = vcvt.s32.f32 %v355
    %v372 = vcvt.s32.f32 %v356
    %v373 = vcvt.s32.f32 %v357
    %v374 = vcvt.s32.f32 %v358
    %v375 = vcvt.s32.f32 %v359
    %v376 = vcvt.s32.f32 %v360
    %v377 = vcvt.s32.f32 %v361
    %v378 = vcvt.s32.f32 %v362
    %v379 = vcvt.s32.f32 %v363
    %v380 = vcvt.s32.f32 %v364
    %v381 = vcvt.s32.f32 %v365
    %v382 = vcvt.s32.f32 %v366
    %v383 = vcvt.s32.f32 %v367
    %v384 = vcvt.s32.f32 %v368
    %v385 = vcvt.s32.f32 %v369
    %v386 = vcvt.s32.f32 %v370
    %v387 = vmul.f32 %v287, 2.0
    %v388 = vmul.f32 %v288, 2.0
    %v389 = vmul.f32 %v289, 2.0
    %v390 = vmul.f32 %v290, 2.0
    %v391 = vmul.f32 %v291, 2.0
    %v392 = vmul.f32 %v292, 2.0
    %v393 = vmul.f32 %v293, 2.0
    %v394 = vmul.f32 %v294, 2.0
    %v395 = vmul.f32 %v295, 2.0
    %v396 = vmul.f32 %v296, 2.0
    %v397 = vmul.f32 %v297, 2.0
    %v398 = vmul.f32 %v298, 2.0
    %v399 = vmul.f32 %v299, 2.0
    %v400 = vmul.f32 %v300, 2.0
    %v401 = vmul.f32 %v301, 2.0
    %v402 = vmul.f32 %v302, 2.0
    %v403 = vsub.f32 2.0, %v387
    %v404 = vsub.f32 2.0, %v388
    %v405 = vsub.f32 2.0, %v389
    %v406 = vsub.f32 2.0, %v390
    %v407 = vsub.f32 2.0, %v391
    %v408 = vsub.f32 2.0, %v392
    %v409 = vsub.f32 2.0, %v393
    %v410 = vsub.f32 2.0, %v394
    %v411 = vsub.f32 2.0, %v395
    %v412 = vsub.f32 2.0, %v396
    %v413 = vsub.f32 2.0, %v397
    %v414 = vsub.f32 2.0, %v398
    %v415 = vsub.f32 2.0, %v399
    %v416 = vsub.f32 2.0, %v400
    %v417 = vsub.f32 2.0, %v401
    %v418 = vsub.f32 2.0, %v402
    %v419 = vadd.f32 %v403, %v371
    %v420 = vadd.f32 %v404, %v372
    %v421 = vadd.f32 %v405, %v373
    %v422 = vadd.f32 %v406, %v374
    %v423 = vadd.f32 %v407, %v375
    %v424 = vadd.f32 %v408, %v376
    %v425 = vadd.f32 %v409, %v377
    %v426 = vadd.f32 %v410, %v378
    %v427 = vadd.f32 %v411, %v379
    %v428 = vadd.f32 %v412, %v380
    %v429 = vadd.f32 %v413, %v381
    %v430 = vadd.f32 %v414, %v382
    %v431 = vadd.f32 %v415, %v383
    %v432 = vadd.f32 %v416, %v384
    %v433 = vadd.f32 %v417, %v385
    %v434 = vadd.f32 %v418, %v386
    %v435 = vmax.f32 %v419, 0.25
    %v436 = vmax.f32 %v420, 0.25
    %v437 = vmax.f32 %v421, 0.25
    %v438 = vmax.f32 %v422, 0.25
    %v439 = vmax.f32 %v423, 0.25
    %v440 = vmax.f32 %v424, 0.25
    %v441 = vmax.f32 %v425, 0.25
    %v442 = vmax.f32 %v426, 0.25
    %v443 = vmax.f32 %v427, 0.25
    %v444 = vmax.f32 %v428, 0.25
    %v445 = vmax.f32 %v429, 0.25
    %v446 = vmax.f32 %v430, 0.25
    %v447 = vmax.f32 %v431, 0.25
    %v448 = vmax.f32 %v432, 0.25
    %v449 = vmax.f32 %v433, 0.25
    %v450 = vmax.f32 %v434, 0.25
    %v451 = vlog2.pop %v435
    %v452 = vmul.f32 %v451, 0.6931472
    %v453 = vlog2.pop %v436
    %v454 = vmul.f32 %v453, 0.6931472
    %v455 = vlog2.pop %v437
    %v456 = vmul.f32 %v455, 0.6931472
    %v457 = vlog2.pop %v438
    %v458 = vmul.f32 %v457, 0.6931472
    %v459 = vlog2.pop %v439
    %v460 = vmul.f32 %v459, 0.6931472
    %v461 = vlog2.pop %v440
    %v462 = vmul.f32 %v461, 0.6931472
    %v463 = vlog2.pop %v441
    %v464 = vmul.f32 %v463, 0.6931472
    %v465 = vlog2.pop %v442
    %v466 = vmul.f32 %v465, 0.6931472
    %v467 = vlog2.pop %v443
    %v468 = vmul.f32 %v467, 0.6931472
    %v469 = vlog2.pop %v444
    %v470 = vmul.f32 %v469, 0.6931472
    %v471 = vlog2.pop %v445
    %v472 = vmul.f32 %v471, 0.6931472
    %v473 = vlog2.pop %v446
    %v474 = vmul.f32 %v473, 0.6931472
    %v475 = vlog2.pop %v447
    %v476 = vmul.f32 %v475, 0.6931472
    %v477 = vlog2.pop %v448
    %v478 = vmul.f32 %v477, 0.6931472
    %v479 = vlog2.pop %v449
    %v480 = vmul.f32 %v479, 0.6931472
    %v481 = vlog2.pop %v450
    %v482 = vmul.f32 %v481, 0.6931472
    %v483 = vmul.f32 %v452, -15.0
    %v484 = vmul.f32 %v454, -15.0
    %v485 = vmul.f32 %v456, -15.0
    %v486 = vmul.f32 %v458, -15.0
    %v487 = vmul.f32 %v460, -15.0
    %v488 = vmul.f32 %v462, -15.0
    %v489 = vmul.f32 %v464, -15.0
    %v490 = vmul.f32 %v466, -15.0
    %v491 = vmul.f32 %v468, -15.0
    %v492 = vmul.f32 %v470, -15.0
    %v493 = vmul.f32 %v472, -15.0
    %v494 = vmul.f32 %v474, -15.0
    %v495 = vmul.f32 %v476, -15.0
    %v496 = vmul.f32 %v478, -15.0
    %v497 = vmul.f32 %v480, -15.0
    %v498 = vmul.f32 %v482, -15.0
    %v499 = vmul.f32 %v435, 0.25
    %v500 = vmul.f32 %v436, 0.25
    %v501 = vmul.f32 %v437, 0.25
    %v502 = vmul.f32 %v438, 0.25
    %v503 = vmul.f32 %v439, 0.25
    %v504 = vmul.f32 %v440, 0.25
    %v505 = vmul.f32 %v441, 0.25
    %v506 = vmul.f32 %v442, 0.25
    %v507 = vmul.f32 %v443, 0.25
    %v508 = vmul.f32 %v444, 0.25
    %v509 = vmul.f32 %v445, 0.25
    %v510 = vmul.f32 %v446, 0.25
    %v511 = vmul.f32 %v447, 0.25
    %v512 = vmul.f32 %v448, 0.25
    %v513 = vmul.f32 %v449, 0.25
    %v514 = vmul.f32 %v450, 0.25
    %v515 = vsub.f32 1.0, %v499
    %v516 = vsub.f32 1.0, %v500
    %v517 = vsub.f32 1.0, %v501
    %v518 = vsub.f32 1.0, %v502
    %v519 = vsub.f32 1.0, %v503
    %v520 = vsub.f32 1.0, %v504
    %v521 = vsub.f32 1.0, %v505
    %v522 = vsub.f32 1.0, %v506
    %v523 = vsub.f32 1.0, %v507
    %v524 = vsub.f32 1.0, %v508
    %v525 = vsub.f32 1.0, %v509
    %v526 = vsub.f32 1.0, %v510
    %v527 = vsub.f32 1.0, %v511
    %v528 = vsub.f32 1.0, %v512
    %v529 = vsub.f32 1.0, %v513
    %v530 = vsub.f32 1.0, %v514
    %v531 = vmax.f32 %v515, 1e-08
    %v532 = vmax.f32 %v516, 1e-08
    %v533 = vmax.f32 %v517, 1e-08
    %v534 = vmax.f32 %v518, 1e-08
    %v535 = vmax.f32 %v519, 1e-08
    %v536 = vmax.f32 %v520, 1e-08
    %v537 = vmax.f32 %v521, 1e-08
    %v538 = vmax.f32 %v522, 1e-08
    %v539 = vmax.f32 %v523, 1e-08
    %v540 = vmax.f32 %v524, 1e-08
    %v541 = vmax.f32 %v525, 1e-08
    %v542 = vmax.f32 %v526, 1e-08
    %v543 = vmax.f32 %v527, 1e-08
    %v544 = vmax.f32 %v528, 1e-08
    %v545 = vmax.f32 %v529, 1e-08
    %v546 = vmax.f32 %v530, 1e-08
    %v547 = vlog2.pop %v531
    %v548 = vmul.f32 %v547, 0.6931472
    %v549 = vlog2.pop %v532
    %v550 = vmul.f32 %v549, 0.6931472
    %v551 = vlog2.pop %v533
    %v552 = vmul.f32 %v551, 0.6931472
    %v553 = vlog2.pop %v534
    %v554 = vmul.f32 %v553, 0.6931472
    %v555 = vlog2.pop %v535
    %v556 = vmul.f32 %v555, 0.6931472
    %v557 = vlog2.pop %v536
    %v558 = vmul.f32 %v557, 0.6931472
    %v559 = vlog2.pop %v537
    %v560 = vmul.f32 %v559, 0.6931472
    %v561 = vlog2.pop %v538
    %v562 = vmul.f32 %v561, 0.6931472
    %v563 = vlog2.pop %v539
    %v564 = vmul.f32 %v563, 0.6931472
    %v565 = vlog2.pop %v540
    %v566 = vmul.f32 %v565, 0.6931472
    %v567 = vlog2.pop %v541
    %v568 = vmul.f32 %v567, 0.6931472
    %v569 = vlog2.pop %v542
    %v570 = vmul.f32 %v569, 0.6931472
    %v571 = vlog2.pop %v543
    %v572 = vmul.f32 %v571, 0.6931472
    %v573 = vlog2.pop %v544
    %v574 = vmul.f32 %v573, 0.6931472
    %v575 = vlog2.pop %v545
    %v576 = vmul.f32 %v575, 0.6931472
    %v577 = vlog2.pop %v546
    %v578 = vmul.f32 %v577, 0.6931472
    %v579 = vmul.f32 %v548, 14.5
    %v580 = vmul.f32 %v550, 14.5
    %v581 = vmul.f32 %v552, 14.5
    %v582 = vmul.f32 %v554, 14.5
    %v583 = vmul.f32 %v556, 14.5
    %v584 = vmul.f32 %v558, 14.5
    %v585 = vmul.f32 %v560, 14.5
    %v586 = vmul.f32 %v562, 14.5
    %v587 = vmul.f32 %v564, 14.5
    %v588 = vmul.f32 %v566, 14.5
    %v589 = vmul.f32 %v568, 14.5
    %v590 = vmul.f32 %v570, 14.5
    %v591 = vmul.f32 %v572, 14.5
    %v592 = vmul.f32 %v574, 14.5
    %v593 = vmul.f32 %v576, 14.5
    %v594 = vmul.f32 %v578, 14.5
    %v595 = vsub.f32 %v483, %v579
    %v596 = vsub.f32 %v484, %v580
    %v597 = vsub.f32 %v485, %v581
    %v598 = vsub.f32 %v486, %v582
    %v599 = vsub.f32 %v487, %v583
    %v600 = vsub.f32 %v488, %v584
    %v601 = vsub.f32 %v489, %v585
    %v602 = vsub.f32 %v490, %v586
    %v603 = vsub.f32 %v491, %v587
    %v604 = vsub.f32 %v492, %v588
    %v605 = vsub.f32 %v493, %v589
    %v606 = vsub.f32 %v494, %v590
    %v607 = vsub.f32 %v495, %v591
    %v608 = vsub.f32 %v496, %v592
    %v609 = vsub.f32 %v497, %v593
    %v610 = vsub.f32 %v498, %v594
    %vm611 = vcmp.lt.s32.totalorder %v321, 8
    %vm612 = vcmp.lt.s32.totalorder %v322, 8
    %vm613 = vcmp.lt.s32.totalorder %v323, 8
    %vm614 = vcmp.lt.s32.totalorder %v324, 8
    %vm615 = vcmp.lt.s32.totalorder %v325, 8
    %vm616 = vcmp.lt.s32.totalorder %v326, 8
    %vm617 = vcmp.lt.s32.totalorder %v327, 8
    %vm618 = vcmp.lt.s32.totalorder %v328, 8
    %vm619 = vcmp.lt.s32.totalorder %v329, 8
    %vm620 = vcmp.lt.s32.totalorder %v330, 8
    %vm621 = vcmp.lt.s32.totalorder %v331, 8
    %vm622 = vcmp.lt.s32.totalorder %v332, 8
    %vm623 = vcmp.lt.s32.totalorder %v333, 8
    %vm624 = vcmp.lt.s32.totalorder %v334, 8
    %vm625 = vcmp.lt.s32.totalorder %v335, 8
    %vm626 = vcmp.lt.s32.totalorder %v336, 8
    %vm627 = vcmp.lt.s32.totalorder %v338, 8
    %v628 = vsel %vm611, 1, 0
    %v629 = vsel %vm612, 1, 0
    %v630 = vsel %vm613, 1, 0
    %v631 = vsel %vm614, 1, 0
    %v632 = vsel %vm615, 1, 0
    %v633 = vsel %vm616, 1, 0
    %v634 = vsel %vm617, 1, 0
    %v635 = vsel %vm618, 1, 0
    %v636 = vsel %vm619, 1, 0
    %v637 = vsel %vm620, 1, 0
    %v638 = vsel %vm621, 1, 0
    %v639 = vsel %vm622, 1, 0
    %v640 = vsel %vm623, 1, 0
    %v641 = vsel %vm624, 1, 0
    %v642 = vsel %vm625, 1, 0
    %v643 = vsel %vm626, 1, 0
    %vm644 = vcmp.eq.s32.totalorder %v628, 1
    %vm645 = vcmp.eq.s32.totalorder %v629, 1
    %vm646 = vcmp.eq.s32.totalorder %v630, 1
    %vm647 = vcmp.eq.s32.totalorder %v631, 1
    %vm648 = vcmp.eq.s32.totalorder %v632, 1
    %vm649 = vcmp.eq.s32.totalorder %v633, 1
    %vm650 = vcmp.eq.s32.totalorder %v634, 1
    %vm651 = vcmp.eq.s32.totalorder %v635, 1
    %vm652 = vcmp.eq.s32.totalorder %v636, 1
    %vm653 = vcmp.eq.s32.totalorder %v637, 1
    %vm654 = vcmp.eq.s32.totalorder %v638, 1
    %vm655 = vcmp.eq.s32.totalorder %v639, 1
    %vm656 = vcmp.eq.s32.totalorder %v640, 1
    %vm657 = vcmp.eq.s32.totalorder %v641, 1
    %vm658 = vcmp.eq.s32.totalorder %v642, 1
    %vm659 = vcmp.eq.s32.totalorder %v643, 1
    %v660 = vsel %vm627, 1, 0
    %vm661 = vcmp.eq.s32.totalorder %v660, 1
    %vm662 = vmand %vm644, %vm661
    %vm663 = vmand %vm645, %vm661
    %vm664 = vmand %vm646, %vm661
    %vm665 = vmand %vm647, %vm661
    %vm666 = vmand %vm648, %vm661
    %vm667 = vmand %vm649, %vm661
    %vm668 = vmand %vm650, %vm661
    %vm669 = vmand %vm651, %vm661
    %vm670 = vmand %vm652, %vm661
    %vm671 = vmand %vm653, %vm661
    %vm672 = vmand %vm654, %vm661
    %vm673 = vmand %vm655, %vm661
    %vm674 = vmand %vm656, %vm661
    %vm675 = vmand %vm657, %vm661
    %vm676 = vmand %vm658, %vm661
    %vm677 = vmand %vm659, %vm661
    %v678 = vsel %vm662, %v595, -3e+38
    %v679 = vsel %vm663, %v596, -3e+38
    %v680 = vsel %vm664, %v597, -3e+38
    %v681 = vsel %vm665, %v598, -3e+38
    %v682 = vsel %vm666, %v599, -3e+38
    %v683 = vsel %vm667, %v600, -3e+38
    %v684 = vsel %vm668, %v601, -3e+38
    %v685 = vsel %vm669, %v602, -3e+38
    %v686 = vsel %vm670, %v603, -3e+38
    %v687 = vsel %vm671, %v604, -3e+38
    %v688 = vsel %vm672, %v605, -3e+38
    %v689 = vsel %vm673, %v606, -3e+38
    %v690 = vsel %vm674, %v607, -3e+38
    %v691 = vsel %vm675, %v608, -3e+38
    %v692 = vsel %vm676, %v609, -3e+38
    %v693 = vsel %vm677, %v610, -3e+38
    %v694 = vmax.f32 %v678, %v682
    %v695 = vmax.f32 %v679, %v683
    %v696 = vmax.f32 %v680, %v684
    %v697 = vmax.f32 %v681, %v685
    %v698 = vmax.f32 %v694, %v686
    %v699 = vmax.f32 %v695, %v687
    %v700 = vmax.f32 %v696, %v688
    %v701 = vmax.f32 %v697, %v689
    %v702 = vmax.f32 %v698, %v690
    %v703 = vmax.f32 %v699, %v691
    %v704 = vmax.f32 %v700, %v692
    %v705 = vmax.f32 %v701, %v693
    %v706 = vmax.f32 %v702, %v703
    %v707 = vmax.f32 %v704, %v705
    %v708 = vmax.f32 %v706, %v707
    %709 = vmax.xlane.f32.xlu0 %v708
    %v710 = vpop.xlane.xlu0 %709
    %v711 = vrot.slane %v710, 4
    %v712 = vmax.f32 %v710, %v711
    %v713 = vrot.slane %v712, 2
    %v714 = vmax.f32 %v712, %v713
    %v715 = vrot.slane %v714, 1
    %v716 = vmax.f32 %v714, %v715
    %s717 = vtos %v716
    %v718 = vsel %vm662, %v595, 3e+38
    %v719 = vsel %vm663, %v596, 3e+38
    %v720 = vsel %vm664, %v597, 3e+38
    %v721 = vsel %vm665, %v598, 3e+38
    %v722 = vsel %vm666, %v599, 3e+38
    %v723 = vsel %vm667, %v600, 3e+38
    %v724 = vsel %vm668, %v601, 3e+38
    %v725 = vsel %vm669, %v602, 3e+38
    %v726 = vsel %vm670, %v603, 3e+38
    %v727 = vsel %vm671, %v604, 3e+38
    %v728 = vsel %vm672, %v605, 3e+38
    %v729 = vsel %vm673, %v606, 3e+38
    %v730 = vsel %vm674, %v607, 3e+38
    %v731 = vsel %vm675, %v608, 3e+38
    %v732 = vsel %vm676, %v609, 3e+38
    %v733 = vsel %vm677, %v610, 3e+38
    %v734 = vmin.f32 %v718, %v722
    %v735 = vmin.f32 %v719, %v723
    %v736 = vmin.f32 %v720, %v724
    %v737 = vmin.f32 %v721, %v725
    %v738 = vmin.f32 %v734, %v726
    %v739 = vmin.f32 %v735, %v727
    %v740 = vmin.f32 %v736, %v728
    %v741 = vmin.f32 %v737, %v729
    %v742 = vmin.f32 %v738, %v730
    %v743 = vmin.f32 %v739, %v731
    %v744 = vmin.f32 %v740, %v732
    %v745 = vmin.f32 %v741, %v733
    %v746 = vmin.f32 %v742, %v743
    %v747 = vmin.f32 %v744, %v745
    %v748 = vmin.f32 %v746, %v747
    %749 = vmin.xlane.f32.xlu0 %v748
    %v750 = vpop.xlane.xlu0 %749
    %v751 = vrot.slane %v750, 4
    %v752 = vmin.f32 %v750, %v751
    %v753 = vrot.slane %v752, 2
    %v754 = vmin.f32 %v752, %v753
    %v755 = vrot.slane %v754, 1
    %v756 = vmin.f32 %v754, %v755
    %s757 = vtos %v756
    %vm758 = vcmp.eq.s32.totalorder %v304, 0
    %v759 = vstv %s717
    %v760 = vstv %s757
    %v761 = vsel %vm758, %v759, %v760
    %762 = vst [vmem:[#allocation2] sm:$0xff] %v761
    // Predicated region
    $region10: #{tpu_custom_call.1} parent=1 // pred_check
      _
    $region11: #{tpu_custom_call.1} parent=1 // pred_check_branch
      %764 = sbr.rel (0) target = $region13
    $region12: #{tpu_custom_call.1} parent=1 // pred_region
      %s766 = ssub.s32 128, 128
      %767 = vsyncadd [#allocation3], %s766
      %s769 = sshll.u32 [#allocation2], 4
      %s770 = int_to_ptr.vmem [resolvable:$true] %s769
      %772 = dma.vmem_to_hbm [thread:$0]  %s770, 128, %s2, [#allocation3]
    $region13: #{tpu_custom_call.1} parent=1 // pred_fallthru
      _
    // Predicated region
    $region14: #{tpu_custom_call.1} parent=1 // pred_check
      _
    $region15: #{tpu_custom_call.1} parent=1 // pred_check_branch
      %774 = sbr.rel (0) target = $region17
    $region16: #{tpu_custom_call.1} parent=1 // pred_region
      %775 = dma.done [#allocation3], 128
    $region17: #{tpu_custom_call.1} parent=1 // pred_fallthru
      _
    %776 = vsyncpa [#allocation3], 1

</llo_original>
